<compile_context>
chip_gen: v7x
topology: tpu7x:2x2x1
jax: 0.10.0
libtpu: 0.0.40
codegen_flags: <defaults>
</compile_context>

<pallas_src>
import jax
import jax.numpy as jnp
from jax import lax
from jax.experimental import pallas as pl
from jax.experimental.pallas import tpu as pltpu


def _round_up(x, m):
    return (x + m - 1) // m * m


# ---------------------------------------------------------------------------
# Kernel
# ---------------------------------------------------------------------------
def embed_kernel(x_ref, w1_ref, b1_ref, w2_ref, b2_ref, o_ref):
    # Cast x to the weight dtype inside the kernel (VPU; free in a mem-bound
    # kernel) so the wrapper never makes an extra HBM pass over x.
    x = x_ref[...].astype(w1_ref.dtype)
    # First matmul on the MXU, f32 accumulation, f32 bias add, ReLU on the VPU.
    h = jnp.dot(x, w1_ref[...], preferred_element_type=jnp.float32) + b1_ref[...]
    h = jnp.maximum(h, 0.0)
    # Second matmul: keep the MXU in the weight dtype, accumulate in f32.
    y = jnp.dot(h.astype(w2_ref.dtype), w2_ref[...],
                preferred_element_type=jnp.float32) + b2_ref[...]
    # L2 normalization (power=2) in f32: rsqrt on the EUP, multiply on the VPU.
    ss = jnp.sum(y * y, axis=1, keepdims=True)                    # (tb, 1)
    o_ref[...] = (y * lax.rsqrt(ss + 1e-12)).astype(o_ref.dtype)


# ---------------------------------------------------------------------------
# One-time parameter preprocessing (caller-owned; do NOT redo per forward call)
# ---------------------------------------------------------------------------
def prepare_params(w1_t, b1, w2_t, b2, *, weight_dtype=jnp.bfloat16):
    """Cast weights once and lane-pad dim_out to a multiple of 128.

    Padded columns/rows are zero so they contribute nothing to the second
    matmul or to the L2 norm; the wrapper slices them off the output.
    """
    dim_in, dim_out = w1_t.shape
    assert w2_t.shape == (dim_out, dim_out)
    assert b1.shape == (dim_out,) and b2.shape == (dim_out,)
    d_pad = _round_up(dim_out, 128)
    if d_pad != dim_out:
        p = d_pad - dim_out
        w1_t = jnp.pad(w1_t, ((0, 0), (0, p)))
        w2_t = jnp.pad(w2_t, ((0, p), (0, p)))
        b1 = jnp.pad(b1, (0, p))
        b2 = jnp.pad(b2, (0, p))
    return (w1_t.astype(weight_dtype),
            jnp.reshape(b1, (1, d_pad)).astype(jnp.float32),
            w2_t.astype(weight_dtype),
            jnp.reshape(b2, (1, d_pad)).astype(jnp.float32),
            dim_out)


# ---------------------------------------------------------------------------
# Hardware query + tile selection
# ---------------------------------------------------------------------------
def _tpu_vmem_and_cores():
    try:
        vmem_cap = pltpu.get_tpu_info().vmem_capacity_bytes
    except Exception:
        vmem_cap = 64 * 2**20               # conservative (v7x per-TC VMEM)
    try:
        kind = jax.devices()[0].device_kind.lower()
    except Exception:
        kind = ""
    n_cores = 2 if "v7" in kind else 1      # v7x: 2 TensorCores per chip
    return vmem_cap, n_cores


def _vmem_footprint(tb, dim_in, d_pad, x_bytes, w_bytes, out_bytes):
    return (2 * tb * dim_in * x_bytes              # double-buffered x tiles
            + 2 * tb * d_pad * out_bytes           # double-buffered out tiles
            + 2 * (dim_in + d_pad) * d_pad * w_bytes   # W1 + W2 buffers
            + 4 * 2 * d_pad * 4                    # biases
            + 2 * tb * d_pad * 4)                  # live f32 temporaries h, y


def _pick_tb(B, dim_in, d_pad, x_bytes, w_bytes, out_bytes, vmem_cap, n_cores):
    budget = int(0.6 * vmem_cap)            # headroom for compiler scratch
    cap_rows = 2048                         # fat tiles amortize ~0.35us/step
    if n_cores > 1 and B >= 32:
        target = _round_up(pl.cdiv(B, 2), 16)   # feed both v7x TensorCores
    else:
        target = _round_up(B, 16)               # single TC: one tile if it fits
    tb = max(16, min(cap_rows, target))
    while tb > 16 and _vmem_footprint(tb, dim_in, d_pad,
                                      x_bytes, w_bytes, out_bytes) > budget:
        tb -= 16
    if n_cores > 1:
        nb = pl.cdiv(B, tb)
        if nb > 1 and nb % 2 == 1:          # keep the 2 TensorCores balanced
            tb = max(16, _round_up(pl.cdiv(B, nb + 1), 16))
    return tb


# ---------------------------------------------------------------------------
# Forward wrapper
# ---------------------------------------------------------------------------
def embed_forward(x, params, *, tb=None, out_dtype=jnp.bfloat16):
    """y = L2Normalize(Linear2(ReLU(Linear1(x)))).  x: (B, dim_in)."""
    w1c, b1c, w2c, b2c, dim_out = params
    B, dim_in = x.shape
    d_pad = w1c.shape[1]
    assert w1c.shape == (dim_in, d_pad)
    assert w2c.shape == (d_pad, d_pad)

    vmem_cap, n_cores = _tpu_vmem_and_cores()
    x_bytes = jnp.dtype(x.dtype).itemsize
    w_bytes = jnp.dtype(w1c.dtype).itemsize
    out_bytes = jnp.dtype(out_dtype).itemsize
    if tb is None:
        tb = _pick_tb(B, dim_in, d_pad, x_bytes, w_bytes, out_bytes,
                      vmem_cap, n_cores)
    fp = _vmem_footprint(tb, dim_in, d_pad, x_bytes, w_bytes, out_bytes)
    vmem_limit = int(min(0.9 * vmem_cap, max(32 * 2**20, 2 * fp + (8 << 20))))

    # Ragged last block: OOB input rows read unspecified (row-local) data and
    # the corresponding output rows are masked on the write — no host pad/slice.
    n_blocks = pl.cdiv(B, tb)

    out = pl.pallas_call(
        embed_kernel,
        out_shape=jax.ShapeDtypeStruct((B, d_pad), out_dtype),
        grid_spec=pltpu.PrefetchScalarGridSpec(
            num_scalar_prefetch=0,
            grid=(n_blocks,),
            in_specs=[
                pl.BlockSpec((tb, dim_in), lambda i: (i, 0)),     # x tile
                pl.BlockSpec((dim_in, d_pad), lambda i: (0, 0)),  # W1^T (resident)
                pl.BlockSpec((1, d_pad), lambda i: (0, 0)),       # b1
                pl.BlockSpec((d_pad, d_pad), lambda i: (0, 0)),   # W2^T (resident)
                pl.BlockSpec((1, d_pad), lambda i: (0, 0)),       # b2
            ],
            out_specs=pl.BlockSpec((tb, d_pad), lambda i: (i, 0)),
        ),
        compiler_params=pltpu.CompilerParams(
            dimension_semantics=("parallel",),
            vmem_limit_bytes=vmem_limit),
    )(x, w1c, b1c, w2c, b2c)

    return out if d_pad == dim_out else out[:, :dim_out]


# ---------------------------------------------------------------------------
# References
# ---------------------------------------------------------------------------
def embed_reference(x, w1_t, b1, w2_t, b2):
    """Pure f32 reference (PyTorch semantics)."""
    h = jnp.maximum(
        jnp.dot(x, w1_t, precision=lax.Precision.HIGHEST) + b1[None, :], 0.0)
    y = jnp.dot(h, w2_t, precision=lax.Precision.HIGHEST) + b2[None, :]
    return y / jnp.sqrt(jnp.sum(y * y, axis=1, keepdims=True) + 1e-12)


def embed_reference_mixed(x, w1_t, b1, w2_t, b2, dtype=jnp.bfloat16):
    """Reference mirroring the kernel's bf16-rounding points."""
    f32 = jnp.float32
    xb = x.astype(dtype).astype(f32)
    w1b = w1_t.astype(dtype).astype(f32)
    w2b = w2_t.astype(dtype).astype(f32)
    h = jnp.maximum(
        jnp.dot(xb, w1b, precision=lax.Precision.HIGHEST) + b1[None, :], 0.0)
    h = h.astype(dtype).astype(f32)
    y = jnp.dot(h, w2b, precision=lax.Precision.HIGHEST) + b2[None, :]
    return y / jnp.sqrt(jnp.sum(y * y, axis=1, keepdims=True) + 1e-12)


if __name__ == "__main__":
    # Small shapes consistent with Embed(dim_in, dim_out)
    B, dim_in, dim_out = 16, 32, 128

    key = jax.random.PRNGKey(0)
    kx, kw1, kb1, kw2, kb2 = jax.random.split(key, 5)

    x = jax.random.normal(kx, (B, dim_in), dtype=jnp.float32)
    # PyTorch Linear params, stored pre-transposed: W (in, out), b (out,)
    w1_t = jax.random.normal(kw1, (dim_in, dim_out), dtype=jnp.float32) * 0.05
    b1 = jax.random.normal(kb1, (dim_out,), dtype=jnp.float32) * 0.01
    w2_t = jax.random.normal(kw2, (dim_out, dim_out), dtype=jnp.float32) * 0.05
    b2 = jax.random.normal(kb2, (dim_out,), dtype=jnp.float32) * 0.01

    ref_f32 = embed_reference(x, w1_t, b1, w2_t, b2)
    ref_mixed = embed_reference_mixed(x, w1_t, b1, w2_t, b2)

    # --- default path: bf16 weights (pre-cast once), bf16 output store -----
    params_bf16 = prepare_params(w1_t, b1, w2_t, b2, weight_dtype=jnp.bfloat16)
    out = jax.block_until_ready(embed_forward(x, params_bf16))
    assert out.shape == (B, dim_out) and out.dtype == jnp.bfloat16
    out_f32 = out.astype(jnp.float32)
    assert jnp.allclose(out_f32, ref_mixed, atol=1.5e-2, rtol=1.5e-2), \
        "bf16 kernel mismatch vs bf16-rounded reference"
    assert jnp.allclose(out_f32, ref_f32, atol=4e-2, rtol=4e-2), \
        "bf16 kernel sanity check vs f32 reference"
    assert jnp.allclose(jnp.linalg.norm(out_f32, axis=1), 1.0, atol=1e-2), \
        "output rows not (approximately) unit-norm"

    # --- full-f32 path: validates the kernel structure itself --------------
    params_f32 = prepare_params(w1_t, b1, w2_t, b2, weight_dtype=jnp.float32)
    out32 = jax.block_until_ready(
        embed_forward(x, params_f32, out_dtype=jnp.float32))
    assert out32.shape == (B, dim_out) and out32.dtype == jnp.float32
    assert jnp.allclose(out32, ref_f32, atol=1e-2, rtol=1e-2), \
        "f32 kernel mismatch vs f32 reference"

    # --- ragged batch (B % tb != 0): exercises the masked last block -------
    Br = 20
    xr = jax.random.normal(jax.random.PRNGKey(1), (Br, dim_in), jnp.float32)
    outr = jax.block_until_ready(
        embed_forward(xr, params_f32, tb=16, out_dtype=jnp.float32))
    refr = embed_reference(xr, w1_t, b1, w2_t, b2)
    assert outr.shape == (Br, dim_out)
    assert jnp.allclose(outr, refr, atol=1e-2, rtol=1e-2), \
        "ragged-tail kernel mismatch vs f32 reference"

    print("KERNEL_OK")
</pallas_src>

<mosaic_0001>
module attributes {stable_mosaic.version = 11 : i64} {
  func.func @embed_kernel(%arg0: i32, %arg1: memref<16x32xf32, #tpu.memory_space<vmem>>, %arg2: memref<32x128xbf16, #tpu.memory_space<vmem>>, %arg3: memref<1x128xf32, #tpu.memory_space<vmem>>, %arg4: memref<128x128xbf16, #tpu.memory_space<vmem>>, %arg5: memref<1x128xf32, #tpu.memory_space<vmem>>, %arg6: memref<16x128xbf16, #tpu.memory_space<vmem>>) attributes {dimension_semantics = [#tpu.dimension_semantics<parallel>], iteration_bounds = array<i64: 1>, scalar_prefetch = 0 : i64, scratch_operands = 0 : i64, tpu.core_type = #tpu.core_type<tc>, window_params = [{transform_indices = @transform_0, window_bounds = array<i64: 16, 32>}, {pipeline_mode = #tpu.pipeline_mode<synchronous>, transform_indices = @transform_1, window_bounds = array<i64: 32, 128>}, {pipeline_mode = #tpu.pipeline_mode<synchronous>, transform_indices = @transform_2, window_bounds = array<i64: 1, 128>}, {pipeline_mode = #tpu.pipeline_mode<synchronous>, transform_indices = @transform_3, window_bounds = array<i64: 128, 128>}, {pipeline_mode = #tpu.pipeline_mode<synchronous>, transform_indices = @transform_4, window_bounds = array<i64: 1, 128>}, {transform_indices = @transform_5, window_bounds = array<i64: 16, 128>}]} {
    %c0 = arith.constant 0 : index
    %c0_0 = arith.constant 0 : index
    %0 = vector.load %arg1[%c0, %c0_0] : memref<16x32xf32, #tpu.memory_space<vmem>>, vector<16x32xf32>
    %1 = arith.truncf %0 : vector<16x32xf32> to vector<16x32xbf16>
    %c0_1 = arith.constant 0 : index
    %c0_2 = arith.constant 0 : index
    %2 = vector.load %arg2[%c0_1, %c0_2] : memref<32x128xbf16, #tpu.memory_space<vmem>>, vector<32x128xbf16>
    %cst = arith.constant dense<0.000000e+00> : vector<16x128xf32>
    %3 = tpu.matmul %1, %2, %cst {dimension_numbers = #tpu.dot_dimension_numbers<[1], [0], [0], [1], [0, 0, 1, 1], [], []>} : vector<16x32xbf16>, vector<32x128xbf16>, vector<16x128xf32> -> vector<16x128xf32>
    %c0_3 = arith.constant 0 : index
    %c0_4 = arith.constant 0 : index
    %4 = vector.load %arg3[%c0_3, %c0_4] : memref<1x128xf32, #tpu.memory_space<vmem>>, vector<1x128xf32>
    %5 = vector.broadcast %4 : vector<1x128xf32> to vector<16x128xf32>
    %6 = arith.addf %3, %5 : vector<16x128xf32>
    %cst_5 = arith.constant 0.000000e+00 : f32
    %7 = vector.broadcast %cst_5 : f32 to vector<16x128xf32>
    %8 = arith.maximumf %6, %7 : vector<16x128xf32>
    %9 = arith.truncf %8 : vector<16x128xf32> to vector<16x128xbf16>
    %c0_6 = arith.constant 0 : index
    %c0_7 = arith.constant 0 : index
    %10 = vector.load %arg4[%c0_6, %c0_7] : memref<128x128xbf16, #tpu.memory_space<vmem>>, vector<128x128xbf16>
    %cst_8 = arith.constant dense<0.000000e+00> : vector<16x128xf32>
    %11 = tpu.matmul %9, %10, %cst_8 {dimension_numbers = #tpu.dot_dimension_numbers<[1], [0], [0], [1], [0, 0, 1, 1], [], []>} : vector<16x128xbf16>, vector<128x128xbf16>, vector<16x128xf32> -> vector<16x128xf32>
    %c0_9 = arith.constant 0 : index
    %c0_10 = arith.constant 0 : index
    %12 = vector.load %arg5[%c0_9, %c0_10] : memref<1x128xf32, #tpu.memory_space<vmem>>, vector<1x128xf32>
    %13 = vector.broadcast %12 : vector<1x128xf32> to vector<16x128xf32>
    %14 = arith.addf %11, %13 : vector<16x128xf32>
    %15 = arith.mulf %14, %14 : vector<16x128xf32>
    %cst_11 = arith.constant dense<0.000000e+00> : vector<16xf32>
    %16 = vector.multi_reduction <add>, %15, %cst_11 [1] : vector<16x128xf32> to vector<16xf32>
    %17 = vector.shape_cast %16 : vector<16xf32> to vector<16x1xf32>
    %cst_12 = arith.constant 9.99999996E-13 : f32
    %18 = vector.broadcast %cst_12 : f32 to vector<16x1xf32>
    %19 = arith.addf %17, %18 : vector<16x1xf32>
    %20 = math.rsqrt %19 : vector<16x1xf32>
    %21 = vector.broadcast %20 : vector<16x1xf32> to vector<16x128xf32>
    %22 = arith.mulf %14, %21 : vector<16x128xf32>
    %23 = arith.truncf %22 : vector<16x128xf32> to vector<16x128xbf16>
    %c0_13 = arith.constant 0 : index
    %c0_14 = arith.constant 0 : index
    %24 = vector.load %arg6[%c0_13, %c0_14] : memref<16x128xbf16, #tpu.memory_space<vmem>>, vector<16x128xbf16>
    tpu.vector_store %arg6[%c0_13, %c0_14], %23 {strides = array<i32>} : memref<16x128xbf16, #tpu.memory_space<vmem>>, vector<16x128xbf16>,
    return
  }
  func.func @transform_0(%arg0: i32) -> (i32, i32) {
    %c0_i32 = arith.constant 0 : i32
    %c0_i32_0 = arith.constant 0 : i32
    return %arg0, %c0_i32 : i32, i32
  }
  func.func @transform_1(%arg0: i32) -> (i32, i32) {
    %c0_i32 = arith.constant 0 : i32
    %c0_i32_0 = arith.constant 0 : i32
    %c0_i32_1 = arith.constant 0 : i32
    return %c0_i32, %c0_i32_0 : i32, i32
  }
  func.func @transform_2(%arg0: i32) -> (i32, i32) {
    %c0_i32 = arith.constant 0 : i32
    %c0_i32_0 = arith.constant 0 : i32
    %c0_i32_1 = arith.constant 0 : i32
    return %c0_i32, %c0_i32_0 : i32, i32
  }
  func.func @transform_3(%arg0: i32) -> (i32, i32) {
    %c0_i32 = arith.constant 0 : i32
    %c0_i32_0 = arith.constant 0 : i32
    %c0_i32_1 = arith.constant 0 : i32
    return %c0_i32, %c0_i32_0 : i32, i32
  }
  func.func @transform_4(%arg0: i32) -> (i32, i32) {
    %c0_i32 = arith.constant 0 : i32
    %c0_i32_0 = arith.constant 0 : i32
    %c0_i32_1 = arith.constant 0 : i32
    return %c0_i32, %c0_i32_0 : i32, i32
  }
  func.func @transform_5(%arg0: i32) -> (i32, i32) {
    %c0_i32 = arith.constant 0 : i32
    %c0_i32_0 = arith.constant 0 : i32
    return %arg0, %c0_i32 : i32, i32
  }
}

</mosaic_0001>

<llo_original>
// kernel: tpu_custom_call.1
$region0: #{tpu_custom_call.1}
  #allocation0 [shape = 'u32[]', space=smem, size = 0x4, offset = 0x4, fixed_abs, tag = 'smem constant byte address 0x4 - core index']
  #allocation1 [shape = 'u32[144,128]{1,0:T(1,128)}', space=vmem, size = 0x12000, scoped, tag = 'internal scratch']
  %s0 = inlined_call_operand.hbm [shape: f32[16,32], index: 0, kind: input, shape index: {}]
  %s1 = inlined_call_operand.hbm [shape: bf16[32,128], index: 1, kind: input, shape index: {}]
  %s2 = inlined_call_operand.vmem [shape: f32[1,128], index: 2, kind: input, shape index: {}]
  %s3 = inlined_call_operand.hbm [shape: bf16[128,128], index: 3, kind: input, shape index: {}]
  %s4 = inlined_call_operand.vmem [shape: f32[1,128], index: 4, kind: input, shape index: {}]
  %s5 = inlined_call_operand.hbm [shape: bf16[16,128], index: 5, kind: output, shape index: {}]
  %s6 = sld [smem:[#allocation0]]
  $region42: #{tpu_custom_call.1} parent=0
    _
  %s8 = ssub.s32 1, %s6
  %s9 = scalar_select 0, %s8, %s6
  $region1: #{tpu_custom_call.1} parent=0
    #allocation2 [shape = 'u8[8192]{0}', space=vmem, size = 0x2000, scoped, tag = 'input window, operand 0, single buffered']
    #allocation3 [shape = 's32[1]{0}', space=sflag, size = 0x4, scoped, tag = 'scoped memory for tpu_custom_call.1']
    #allocation4 [shape = 's32[1]{0}', space=sflag, size = 0x4, scoped, tag = 'scoped memory for tpu_custom_call.1']
    #allocation5 [shape = 'u8[8192]{0}', space=vmem, size = 0x2000, scoped, tag = 'input window, operand 1, single buffered']
    #allocation6 [shape = 's32[1]{0}', space=sflag, size = 0x4, scoped, tag = 'scoped memory for tpu_custom_call.1']
    #allocation7 [shape = 'u8[32768]{0}', space=vmem, size = 0x8000, scoped, tag = 'input window, operand 3, single buffered']
    #allocation8 [shape = 'u8[4096]{0}', space=vmem, size = 0x1000, scoped, tag = 'output window, operand 0, single buffered']
    %10 = vsyncpa [#allocation3], 0
    %11 = vsyncpa [#allocation6], 0
    %12 = vsyncpa [#allocation4], 0
    // Predicated region
    $region2: #{tpu_custom_call.1} parent=1 // pred_check
      _
    $region3: #{tpu_custom_call.1} parent=1 // pred_check_branch
      %14 = sbr.rel (0) target = $region5
    $region4: #{tpu_custom_call.1} parent=1 // pred_region
      %s16 = ssub.s32 256, 256
      %17 = vsyncadd [#allocation3], %s16
      %s18 = sshll.u32 [#allocation2], 4
      %s19 = int_to_ptr.vmem [resolvable:$true] %s18
      %24 = dma.hbm_to_vmem [thread:$0]  %s0, 256, %s19, [#allocation3], 128, 128, 8
    $region5: #{tpu_custom_call.1} parent=1 // pred_fallthru
      _
    // Predicated region
    $region6: #{tpu_custom_call.1} parent=1 // pred_check
      _
    $region7: #{tpu_custom_call.1} parent=1 // pred_check_branch
      %26 = sbr.rel (0) target = $region9
    $region8: #{tpu_custom_call.1} parent=1 // pred_region
      %s28 = ssub.s32 256, 256
      %29 = vsyncadd [#allocation6], %s28
      %s30 = sshll.u32 [#allocation5], 4
      %s31 = int_to_ptr.vmem [resolvable:$true] %s30
      %36 = dma.hbm_to_vmem [thread:$0]  %s1, 256, %s31, [#allocation6], 64, 64, 4
    $region9: #{tpu_custom_call.1} parent=1 // pred_fallthru
      _
    // Predicated region
    $region10: #{tpu_custom_call.1} parent=1 // pred_check
      _
    $region11: #{tpu_custom_call.1} parent=1 // pred_check_branch
      %38 = sbr.rel (0) target = $region13
    $region12: #{tpu_custom_call.1} parent=1 // pred_region
      _
    $region13: #{tpu_custom_call.1} parent=1 // pred_fallthru
      _
    // Predicated region
    $region14: #{tpu_custom_call.1} parent=1 // pred_check
      _
    $region15: #{tpu_custom_call.1} parent=1 // pred_check_branch
      %40 = sbr.rel (0) target = $region17
    $region16: #{tpu_custom_call.1} parent=1 // pred_region
      %s42 = ssub.s32 1024, 1024
      %43 = vsyncadd [#allocation6], %s42
      %s44 = sshll.u32 [#allocation7], 4
      %s45 = int_to_ptr.vmem [resolvable:$true] %s44
      %50 = dma.hbm_to_vmem [thread:$0]  %s3, 1024, %s45, [#allocation6], 64, 64, 4
    $region17: #{tpu_custom_call.1} parent=1 // pred_fallthru
      _
    // Predicated region
    $region18: #{tpu_custom_call.1} parent=1 // pred_check
      _
    $region19: #{tpu_custom_call.1} parent=1 // pred_check_branch
      %52 = sbr.rel (0) target = $region21
    $region20: #{tpu_custom_call.1} parent=1 // pred_region
      _
    $region21: #{tpu_custom_call.1} parent=1 // pred_fallthru
      _
    // Predicated region
    $region22: #{tpu_custom_call.1} parent=1 // pred_check
      _
    $region23: #{tpu_custom_call.1} parent=1 // pred_check_branch
      %54 = sbr.rel (0) target = $region25
    $region24: #{tpu_custom_call.1} parent=1 // pred_region
      %55 = dma.done [#allocation3], 256
    $region25: #{tpu_custom_call.1} parent=1 // pred_fallthru
      _
    // Predicated region
    $region26: #{tpu_custom_call.1} parent=1 // pred_check
      _
    $region27: #{tpu_custom_call.1} parent=1 // pred_check_branch
      %57 = sbr.rel (0) target = $region29
    $region28: #{tpu_custom_call.1} parent=1 // pred_region
      %58 = dma.done [#allocation6], 256
    $region29: #{tpu_custom_call.1} parent=1 // pred_fallthru
      _
    // Predicated region
    $region30: #{tpu_custom_call.1} parent=1 // pred_check
      _
    $region31: #{tpu_custom_call.1} parent=1 // pred_check_branch
      %60 = sbr.rel (0) target = $region33
    $region32: #{tpu_custom_call.1} parent=1 // pred_region
      %61 = dma.done [#allocation6], 1024
    $region33: #{tpu_custom_call.1} parent=1 // pred_fallthru
      _
    %v63 = vld [vmem:[#allocation2] sm:$0xff]
    %v64 = vld [vmem:[#allocation2 + $0x8] sm:$0xff]
    %v65 = vpack.c.bf16 %v64, %v63
    %v66 = vld [vmem:[#allocation5] sm:$0xf]
    %v67 = vld [vmem:[#allocation5 + $0x4] sm:$0xf]
    %v68 = vld [vmem:[#allocation5 + $0x8] sm:$0xf]
    %v69 = vld [vmem:[#allocation5 + $0xc] sm:$0xf]
    %v70 = vld [vmem:[%s2] sm:$0x1]
    %v72 = vlaneseq
    %v73 = vshrl.u32 %v72, 7
    %v74 = vsub.s32 0, %v73
    %v75 = vrot.slane %v70, %v74
    %v81 = vunpack.c.l.b16 %v66
    %v82 = vunpack.c.l.b16 %v67
    %v83 = vunpack.c.l.b16 %v68
    %v84 = vunpack.c.l.b16 %v69
    %v85 = vpack.c.b16 %v82, %v81
    %v86 = vpack.c.b16 %v84, %v83
    %vm89 = vcmask 261120
    %v91 = vsel %vm89, %v65, 0
    %93 = vmatprep.subr.bf16.mxu0 0
    %94 = vmatpush1.bf16.msra.mxu0 %v85
    %95 = vmatprep.subr.bf16.mxu0 0
    %96 = vmatpush1.bf16.msra.mxu0 %v86
    %97 = vmatprep.subr.bf16.mxu0 0
    %98 = vmatpush1.bf16.msra.mxu0 0
    %99 = vmatprep.subr.bf16.mxu0 0
    %100 = vmatpush1.bf16.msra.mxu0 0
    %101 = vmatprep.subr.bf16.mxu0 0
    %102 = vmatpush1.bf16.msra.mxu0 0
    %103 = vmatprep.subr.bf16.mxu0 0
    %104 = vmatpush1.bf16.msra.mxu0 0
    %105 = vmatprep.subr.bf16.mxu0 0
    %106 = vmatpush1.bf16.msra.mxu0 0
    %107 = vmatprep.subr.bf16.mxu0 0
    %108 = vmatpush1.bf16.msra.mxu0 0
    %109 = vmatprep.subr.bf16.mxu0 0
    %110 = vmatpush1.bf16.msra.mxu0 0
    %111 = vmatprep.subr.bf16.mxu0 0
    %112 = vmatpush1.bf16.msra.mxu0 0
    %113 = vmatprep.subr.bf16.mxu0 0
    %114 = vmatpush1.bf16.msra.mxu0 0
    %115 = vmatprep.subr.bf16.mxu0 0
    %116 = vmatpush1.bf16.msra.mxu0 0
    %117 = vmatprep.subr.bf16.mxu0 0
    %118 = vmatpush1.bf16.msra.mxu0 0
    %119 = vmatprep.subr.bf16.mxu0 0
    %120 = vmatpush1.bf16.msra.mxu0 0
    %121 = vmatprep.subr.bf16.mxu0 0
    %122 = vmatpush1.bf16.msra.mxu0 0
    %123 = vmatprep.subr.bf16.mxu0 0
    %124 = vmatpush1.bf16.msra.mxu0 0
    %125 = vmatprep.mubr.bf16.mxu0 0
    %126 = vmatmul.mubr.bf16.gmra.mrb[0].mxu0 %v91
    %v127 = vpop.f32.mrb[0].mxu0
    %v128 = vadd.f32 %v75, %v127
    %v129 = vpop.f32.mrb[0].mxu0
    %v130 = vpop.f32.mrb[0].mxu0
    %v131 = vadd.f32 %v75, %v130
    %v132 = vpop.f32.mrb[0].mxu0
    %133 = vdwg.mxu0
    %v134 = vmax.f32 %v128, 0.0
    %v135 = vmax.f32 %v131, 0.0
    %v136 = vpack.c.bf16 %v135, %v134
    %v137 = vld [vmem:[#allocation7] sm:$0xf]
    %v138 = vld [vmem:[#allocation7 + $0x4] sm:$0xf]
    %v139 = vld [vmem:[#allocation7 + $0x8] sm:$0xf]
    %v140 = vld [vmem:[#allocation7 + $0xc] sm:$0xf]
    %v141 = vld [vmem:[#allocation7 + $0x10] sm:$0xf]
    %v142 = vld [vmem:[#allocation7 + $0x14] sm:$0xf]
    %v143 = vld [vmem:[#allocation7 + $0x18] sm:$0xf]
    %v144 = vld [vmem:[#allocation7 + $0x1c] sm:$0xf]
    %v145 = vld [vmem:[#allocation7 + $0x20] sm:$0xf]
    %v146 = vld [vmem:[#allocation7 + $0x24] sm:$0xf]
    %v147 = vld [vmem:[#allocation7 + $0x28] sm:$0xf]
    %v148 = vld [vmem:[#allocation7 + $0x2c] sm:$0xf]
    %v149 = vld [vmem:[#allocation7 + $0x30] sm:$0xf]
    %v150 = vld [vmem:[#allocation7 + $0x34] sm:$0xf]
    %v151 = vld [vmem:[#allocation7 + $0x38] sm:$0xf]
    %v152 = vld [vmem:[#allocation7 + $0x3c] sm:$0xf]
    %v153 = vld [vmem:[%s4] sm:$0x1]
    %v155 = vlaneseq
    %v156 = vshrl.u32 %v155, 7
    %v157 = vsub.s32 0, %v156
    %v158 = vrot.slane %v153, %v157
    %v176 = vunpack.c.l.b16 %v137
    %v177 = vunpack.c.l.b16 %v138
    %v178 = vunpack.c.l.b16 %v139
    %v179 = vunpack.c.l.b16 %v140
    %v180 = vunpack.c.l.b16 %v141
    %v181 = vunpack.c.l.b16 %v142
    %v182 = vunpack.c.l.b16 %v143
    %v183 = vunpack.c.l.b16 %v144
    %v184 = vunpack.c.l.b16 %v145
    %v185 = vunpack.c.l.b16 %v146
    %v186 = vunpack.c.l.b16 %v147
    %v187 = vunpack.c.l.b16 %v148
    %v188 = vunpack.c.l.b16 %v149
    %v189 = vunpack.c.l.b16 %v150
    %v190 = vunpack.c.l.b16 %v151
    %v191 = vunpack.c.l.b16 %v152
    %v192 = vpack.c.b16 %v177, %v176
    %v193 = vpack.c.b16 %v179, %v178
    %v194 = vpack.c.b16 %v181, %v180
    %v195 = vpack.c.b16 %v183, %v182
    %v196 = vpack.c.b16 %v185, %v184
    %v197 = vpack.c.b16 %v187, %v186
    %v198 = vpack.c.b16 %v189, %v188
    %v199 = vpack.c.b16 %v191, %v190
    %208 = vmatprep.subr.bf16.mxu0 0
    %209 = vmatpush1.bf16.msra.mxu0 %v192
    %210 = vmatprep.subr.bf16.mxu0 0
    %211 = vmatpush1.bf16.msra.mxu0 %v193
    %212 = vmatprep.subr.bf16.mxu0 0
    %213 = vmatpush1.bf16.msra.mxu0 %v194
    %214 = vmatprep.subr.bf16.mxu0 0
    %215 = vmatpush1.bf16.msra.mxu0 %v195
    %216 = vmatprep.subr.bf16.mxu0 0
    %217 = vmatpush1.bf16.msra.mxu0 %v196
    %218 = vmatprep.subr.bf16.mxu0 0
    %219 = vmatpush1.bf16.msra.mxu0 %v197
    %220 = vmatprep.subr.bf16.mxu0 0
    %221 = vmatpush1.bf16.msra.mxu0 %v198
    %222 = vmatprep.subr.bf16.mxu0 0
    %223 = vmatpush1.bf16.msra.mxu0 %v199
    %224 = vmatprep.subr.bf16.mxu0 0
    %225 = vmatpush1.bf16.msra.mxu0 0
    %226 = vmatprep.subr.bf16.mxu0 0
    %227 = vmatpush1.bf16.msra.mxu0 0
    %228 = vmatprep.subr.bf16.mxu0 0
    %229 = vmatpush1.bf16.msra.mxu0 0
    %230 = vmatprep.subr.bf16.mxu0 0
    %231 = vmatpush1.bf16.msra.mxu0 0
    %232 = vmatprep.subr.bf16.mxu0 0
    %233 = vmatpush1.bf16.msra.mxu0 0
    %234 = vmatprep.subr.bf16.mxu0 0
    %235 = vmatpush1.bf16.msra.mxu0 0
    %236 = vmatprep.subr.bf16.mxu0 0
    %237 = vmatpush1.bf16.msra.mxu0 0
    %238 = vmatprep.subr.bf16.mxu0 0
    %239 = vmatpush1.bf16.msra.mxu0 0
    %240 = vmatprep.mubr.bf16.mxu0 0
    %241 = vmatmul.mubr.bf16.gmra.mrb[0].mxu0 %v136
    %v242 = vpop.f32.mrb[0].mxu0
    %v243 = vadd.f32 %v158, %v242
    %v244 = vpop.f32.mrb[0].mxu0
    %v245 = vpop.f32.mrb[0].mxu0
    %v246 = vadd.f32 %v158, %v245
    %v247 = vpop.f32.mrb[0].mxu0
    %248 = vdwg.mxu0
    %v249 = vmul.f32 %v243, %v243
    %v250 = vmul.f32 %v246, %v246
    %251 = vadd.xlane.f32.xlu0 %v249
    %v252 = vpop.xlane.xlu0 %251
    %253 = vadd.xlane.f32.xlu0 %v250
    %v254 = vpop.xlane.xlu0 %253
    %v255 = vadd.f32 %v252, 1e-12
    %v256 = vadd.f32 %v254, 1e-12
    %v257 = vrsqrt.pop %v255
    %v258 = vrsqrt.pop %v256
    %v259 = vmul.f32 %v243, %v257
    %v260 = vmul.f32 %v246, %v258
    %v261 = vpack.c.bf16 %v260, %v259
    %v263 = vunpack.c.l.b16 %v261
    %v264 = vunpack.c.h.b16 %v261
    %v265 = vpack.c.b16 %v263, %v263
    %v266 = vpack.c.b16 %v264, %v264
    %269 = vst [vmem:[#allocation8] sm:$0xf] %v265
    %270 = vst [vmem:[#allocation8 + $0x4] sm:$0xf] %v266
    // Predicated region
    $region34: #{tpu_custom_call.1} parent=1 // pred_check
      _
    $region35: #{tpu_custom_call.1} parent=1 // pred_check_branch
      %272 = sbr.rel (0) target = $region37
    $region36: #{tpu_custom_call.1} parent=1 // pred_region
      %s274 = ssub.s32 128, 128
      %275 = vsyncadd [#allocation4], %s274
      %s276 = sshll.u32 [#allocation8], 4
      %s277 = int_to_ptr.vmem [resolvable:$true] %s276
      %282 = dma.vmem_to_hbm [thread:$0]  %s277, 128, %s5, [#allocation4], 64, 64, 4
    $region37: #{tpu_custom_call.1} parent=1 // pred_fallthru
      _
    // Predicated region
    $region38: #{tpu_custom_call.1} parent=1 // pred_check
      _
    $region39: #{tpu_custom_call.1} parent=1 // pred_check_branch
      %284 = sbr.rel (0) target = $region41
    $region40: #{tpu_custom_call.1} parent=1 // pred_region
      %285 = dma.done [#allocation4], 128
    $region41: #{tpu_custom_call.1} parent=1 // pred_fallthru
      _
    %286 = vsyncpa [#allocation3], 1
    %287 = vsyncpa [#allocation6], 1
    %288 = vsyncpa [#allocation4], 1

</llo_original>
